<compile_context>
chip_gen: v6e
topology: v6e:2x2x1
jax: 0.10.0
libtpu: 0.0.40
codegen_flags: <defaults>
</compile_context>

<pallas_src>
import functools

import jax
import jax.numpy as jnp
from jax.experimental import pallas as pl
from jax.experimental.pallas import tpu as pltpu


def _cdiv(a: int, b: int) -> int:
    return (a + b - 1) // b


def _round_up(a: int, b: int) -> int:
    return _cdiv(a, b) * b


def _resblock_kernel(x_ref, w1_ref, b1_ref, wcat_ref, bcat_ref, o_ref,
                     *, residual_post_relu: bool):
    # x tile: (tm, IN), bf16
    x = x_ref[...]
    in_features = x.shape[-1]

    # First activation: ReLU(feature).
    xr = jnp.maximum(x, 0)

    # h = ReLU( ReLU(x) @ W1 + b1 )   (bf16 operands, f32 accumulation)
    h = jnp.dot(xr, w1_ref[...], preferred_element_type=jnp.float32) + b1_ref[...]
    h = jnp.maximum(h, 0.0).astype(jnp.bfloat16)

    # Second stage: fused weights [W2; Wr] live in one resident VMEM buffer.
    # No activation concatenate: two dots on static, 128-aligned slices of the
    # resident weight avoid materializing a (tm, 2*IN) slab in VMEM.
    w2 = wcat_ref[0:in_features, :]
    wr = wcat_ref[in_features:2 * in_features, :]
    res_in = xr if residual_post_relu else x
    out = (jnp.dot(h, w2, preferred_element_type=jnp.float32)
           + jnp.dot(res_in, wr, preferred_element_type=jnp.float32)
           + bcat_ref[...])

    o_ref[...] = out.astype(o_ref.dtype)


def prepare_params(w1, b1, w2, b2, wr, br):
    """One-time host-side parameter prep (run at init time, NOT per call).

    Weights are stored pre-transposed as (in, out) = W_torch.T so the kernel
    computes x @ W.  conv2 / conv_res weights are fused into a single
    (2*IN, OUT) buffer and a single bias (b2 + br) so the second stage is one
    resident operand.
    """
    in_features = w1.shape[0]
    return {
        "w1": jnp.asarray(w1).astype(jnp.bfloat16),                       # (IN, IN)
        "b1": jnp.asarray(b1, jnp.float32).reshape(1, in_features),       # (1, IN)
        "wcat": jnp.concatenate([jnp.asarray(w2), jnp.asarray(wr)],
                                axis=0).astype(jnp.bfloat16),             # (2*IN, OUT)
        "bcat": (jnp.asarray(b2, jnp.float32)
                 + jnp.asarray(br, jnp.float32)).reshape(1, -1),          # (1, OUT)
    }


def linear_resblock_point(x, params, *, tm: int = 512,
                          out_dtype=jnp.float32,
                          residual_post_relu: bool = True):
    """Forward pass of Linear_ResBlock_point.

    x      : (M, IN) activations (f32 or bf16)
    params : dict from prepare_params()
    """
    M, IN = x.shape
    OUT = params["wcat"].shape[1]
    assert params["w1"].shape == (IN, IN)
    assert params["wcat"].shape == (2 * IN, OUT)

    # ---- tile / grid selection ------------------------------------------
    # Balance blocks so padding is bounded (< 16 rows/step), keep the M tile a
    # multiple of 16 (bf16 sublane pairs), and make the step count a multiple
    # of 2 when M spans more than one tile so both v7x TensorCores get work.
    nsteps = max(_cdiv(M, tm), 1)
    if M > tm:
        nsteps = _round_up(nsteps, 2)
    tm_eff = _round_up(_cdiv(M, nsteps), 16)
    grid_m = _cdiv(M, tm_eff)
    mp = grid_m * tm_eff

    # ---- activations: single cast (+ optional zero-pad) pass -------------
    x_bf = x if x.dtype == jnp.bfloat16 else x.astype(jnp.bfloat16)
    if mp != M:
        x_bf = jnp.pad(x_bf, ((0, mp - M), (0, 0)))

    # ---- VMEM budget / compiler params -----------------------------------
    out_itemsize = jnp.dtype(out_dtype).itemsize
    vmem_need = (2 * tm_eff * IN * 2                 # x tile, double buffered (bf16)
                 + 2 * tm_eff * OUT * out_itemsize   # out tile, double buffered
                 + IN * IN * 2                       # W1, single buffered (bf16)
                 + 2 * IN * OUT * 2                  # [W2; Wr], single buffered (bf16)
                 + (IN + OUT) * 4)                   # biases (f32)
    vmem_limit = None
    if vmem_need > 12 * 1024 * 1024:  # v5e default scoped limit is 16 MiB
        vmem_limit = min(int(vmem_need * 1.25) + (4 << 20), 64 * 1024 * 1024)

    cost = pl.CostEstimate(
        flops=2 * mp * IN * IN + 2 * mp * (2 * IN) * OUT,
        transcendentals=0,
        bytes_accessed=(mp * IN * 2                      # x (bf16)
                        + IN * IN * 2 + 2 * IN * OUT * 2  # weights (bf16)
                        + (IN + OUT) * 4                  # biases
                        + mp * OUT * out_itemsize),       # output
    )

    # Grid-invariant operands: constant index_map + single buffering
    # (no point double-buffering data that never changes).
    def _resident(shape):
        return pl.BlockSpec(shape, lambda i: (0, 0), pipeline_mode=pl.Buffered(1))

    kernel = functools.partial(_resblock_kernel,
                               residual_post_relu=residual_post_relu)

    out = pl.pallas_call(
        kernel,
        out_shape=jax.ShapeDtypeStruct((mp, OUT), out_dtype),
        grid_spec=pltpu.PrefetchScalarGridSpec(
            num_scalar_prefetch=0,
            grid=(grid_m,),
            in_specs=[
                pl.BlockSpec((tm_eff, IN), lambda i: (i, 0)),  # x tile (bf16)
                _resident((IN, IN)),        # W1       (bf16, resident)
                _resident((1, IN)),         # b1       (f32, resident)
                _resident((2 * IN, OUT)),   # [W2; Wr] (bf16, resident)
                _resident((1, OUT)),        # b2 + br  (f32, resident)
            ],
            out_specs=pl.BlockSpec((tm_eff, OUT), lambda i: (i, 0)),
        ),
        compiler_params=pltpu.CompilerParams(
            dimension_semantics=("parallel",),
            vmem_limit_bytes=vmem_limit,
        ),
        cost_estimate=cost,
    )(x_bf, params["w1"], params["b1"], params["wcat"], params["bcat"])

    return out[:M] if mp != M else out


def reference(x, w1, b1, w2, b2, wr, br, *, residual_post_relu=True):
    """Unfused jnp reference with the same bf16-operand / f32-accumulate math."""
    xb = x.astype(jnp.bfloat16)
    xr = jnp.maximum(xb, 0)
    h = jnp.dot(xr, w1.astype(jnp.bfloat16),
                preferred_element_type=jnp.float32) + b1
    h = jnp.maximum(h, 0.0).astype(jnp.bfloat16)
    r = xr if residual_post_relu else xb
    main = jnp.dot(h, w2.astype(jnp.bfloat16),
                   preferred_element_type=jnp.float32) + b2
    res = jnp.dot(r, wr.astype(jnp.bfloat16),
                  preferred_element_type=jnp.float32) + br
    return main + res


if __name__ == "__main__":
    # Small shapes consistent with the module (defaults 1024 -> 256, scaled
    # down for the demo).  Batch deliberately not a multiple of 16 to exercise
    # the padding path.  Note: on v6e/v7x prefer OUT as a multiple of 256 in
    # production configs so the second dot fills the 256-wide MXU.
    BATCH, IN, OUT = 20, 256, 128

    key = jax.random.PRNGKey(0)
    kx, k1, kb1, k2, kb2, kr, kbr = jax.random.split(key, 7)

    x = jax.random.normal(kx, (BATCH, IN), dtype=jnp.float32)

    # Weights stored as (in, out) = W_torch.T.
    w1 = jax.random.normal(k1, (IN, IN), dtype=jnp.float32) / jnp.sqrt(IN)
    b1 = jax.random.normal(kb1, (1, IN), dtype=jnp.float32) * 0.01
    w2 = jax.random.normal(k2, (IN, OUT), dtype=jnp.float32) / jnp.sqrt(IN)
    b2 = jax.random.normal(kb2, (1, OUT), dtype=jnp.float32) * 0.01
    wr = jax.random.normal(kr, (IN, OUT), dtype=jnp.float32) / jnp.sqrt(IN)
    br = jax.random.normal(kbr, (1, OUT), dtype=jnp.float32) * 0.01

    params = prepare_params(w1, b1, w2, b2, wr, br)   # one-time host prep

    out = linear_resblock_point(x, params)
    out = jax.block_until_ready(out)

    ref = reference(x, w1, b1, w2, b2, wr, br)
    assert out.shape == (BATCH, OUT)
    assert jnp.allclose(out, ref, atol=2e-2, rtol=2e-2), "mismatch vs reference"

    print("KERNEL_OK")
</pallas_src>

<mosaic_0001>
module attributes {stable_mosaic.version = 11 : i64} {
  func.func @_resblock_kernel(%arg0: i32, %arg1: memref<32x256xbf16, #tpu.memory_space<vmem>>, %arg2: memref<256x256xbf16, #tpu.memory_space<vmem>>, %arg3: memref<1x256xf32, #tpu.memory_space<vmem>>, %arg4: memref<512x128xbf16, #tpu.memory_space<vmem>>, %arg5: memref<1x128xf32, #tpu.memory_space<vmem>>, %arg6: memref<32x128xf32, #tpu.memory_space<vmem>>) attributes {dimension_semantics = [#tpu.dimension_semantics<parallel>], iteration_bounds = array<i64: 1>, scalar_prefetch = 0 : i64, scratch_operands = 0 : i64, tpu.core_type = #tpu.core_type<tc>, window_params = [{transform_indices = @transform_0, window_bounds = array<i64: 32, 256>}, {pipeline_mode = #tpu.pipeline_mode<synchronous>, transform_indices = @transform_1, window_bounds = array<i64: 256, 256>}, {pipeline_mode = #tpu.pipeline_mode<synchronous>, transform_indices = @transform_2, window_bounds = array<i64: 1, 256>}, {pipeline_mode = #tpu.pipeline_mode<synchronous>, transform_indices = @transform_3, window_bounds = array<i64: 512, 128>}, {pipeline_mode = #tpu.pipeline_mode<synchronous>, transform_indices = @transform_4, window_bounds = array<i64: 1, 128>}, {transform_indices = @transform_5, window_bounds = array<i64: 32, 128>}]} {
    %c0 = arith.constant 0 : index
    %c0_0 = arith.constant 0 : index
    %0 = vector.load %arg1[%c0, %c0_0] : memref<32x256xbf16, #tpu.memory_space<vmem>>, vector<32x256xbf16>
    %cst = arith.constant 0.000000e+00 : bf16
    %1 = vector.broadcast %cst : bf16 to vector<32x256xbf16>
    %2 = arith.maximumf %0, %1 : vector<32x256xbf16>
    %c0_1 = arith.constant 0 : index
    %c0_2 = arith.constant 0 : index
    %3 = vector.load %arg2[%c0_1, %c0_2] : memref<256x256xbf16, #tpu.memory_space<vmem>>, vector<256x256xbf16>
    %cst_3 = arith.constant dense<0.000000e+00> : vector<32x256xf32>
    %4 = tpu.matmul %2, %3, %cst_3 {dimension_numbers = #tpu.dot_dimension_numbers<[1], [0], [0], [1], [0, 0, 1, 1], [], []>} : vector<32x256xbf16>, vector<256x256xbf16>, vector<32x256xf32> -> vector<32x256xf32>
    %c0_4 = arith.constant 0 : index
    %c0_5 = arith.constant 0 : index
    %5 = vector.load %arg3[%c0_4, %c0_5] : memref<1x256xf32, #tpu.memory_space<vmem>>, vector<1x256xf32>
    %6 = vector.broadcast %5 : vector<1x256xf32> to vector<32x256xf32>
    %7 = arith.addf %4, %6 : vector<32x256xf32>
    %cst_6 = arith.constant 0.000000e+00 : f32
    %8 = vector.broadcast %cst_6 : f32 to vector<32x256xf32>
    %9 = arith.maximumf %7, %8 : vector<32x256xf32>
    %10 = arith.truncf %9 : vector<32x256xf32> to vector<32x256xbf16>
    %c0_7 = arith.constant 0 : index
    %c0_8 = arith.constant 0 : index
    %11 = vector.load %arg4[%c0_7, %c0_8] : memref<512x128xbf16, #tpu.memory_space<vmem>>, vector<256x128xbf16>
    %c256 = arith.constant 256 : index
    %c0_9 = arith.constant 0 : index
    %12 = vector.load %arg4[%c256, %c0_9] : memref<512x128xbf16, #tpu.memory_space<vmem>>, vector<256x128xbf16>
    %cst_10 = arith.constant dense<0.000000e+00> : vector<32x128xf32>
    %13 = tpu.matmul %10, %11, %cst_10 {dimension_numbers = #tpu.dot_dimension_numbers<[1], [0], [0], [1], [0, 0, 1, 1], [], []>} : vector<32x256xbf16>, vector<256x128xbf16>, vector<32x128xf32> -> vector<32x128xf32>
    %cst_11 = arith.constant dense<0.000000e+00> : vector<32x128xf32>
    %14 = tpu.matmul %2, %12, %cst_11 {dimension_numbers = #tpu.dot_dimension_numbers<[1], [0], [0], [1], [0, 0, 1, 1], [], []>} : vector<32x256xbf16>, vector<256x128xbf16>, vector<32x128xf32> -> vector<32x128xf32>
    %15 = arith.addf %13, %14 : vector<32x128xf32>
    %c0_12 = arith.constant 0 : index
    %c0_13 = arith.constant 0 : index
    %16 = vector.load %arg5[%c0_12, %c0_13] : memref<1x128xf32, #tpu.memory_space<vmem>>, vector<1x128xf32>
    %17 = vector.broadcast %16 : vector<1x128xf32> to vector<32x128xf32>
    %18 = arith.addf %15, %17 : vector<32x128xf32>
    %c0_14 = arith.constant 0 : index
    %c0_15 = arith.constant 0 : index
    %19 = vector.load %arg6[%c0_14, %c0_15] : memref<32x128xf32, #tpu.memory_space<vmem>>, vector<32x128xf32>
    tpu.vector_store %arg6[%c0_14, %c0_15], %18 {strides = array<i32>} : memref<32x128xf32, #tpu.memory_space<vmem>>, vector<32x128xf32>,
    return
  }
  func.func @transform_0(%arg0: i32) -> (i32, i32) {
    %c0_i32 = arith.constant 0 : i32
    %c0_i32_0 = arith.constant 0 : i32
    return %arg0, %c0_i32 : i32, i32
  }
  func.func @transform_1(%arg0: i32) -> (i32, i32) {
    %c0_i32 = arith.constant 0 : i32
    %c0_i32_0 = arith.constant 0 : i32
    %c0_i32_1 = arith.constant 0 : i32
    return %c0_i32, %c0_i32_0 : i32, i32
  }
  func.func @transform_2(%arg0: i32) -> (i32, i32) {
    %c0_i32 = arith.constant 0 : i32
    %c0_i32_0 = arith.constant 0 : i32
    %c0_i32_1 = arith.constant 0 : i32
    return %c0_i32, %c0_i32_0 : i32, i32
  }
  func.func @transform_3(%arg0: i32) -> (i32, i32) {
    %c0_i32 = arith.constant 0 : i32
    %c0_i32_0 = arith.constant 0 : i32
    %c0_i32_1 = arith.constant 0 : i32
    return %c0_i32, %c0_i32_0 : i32, i32
  }
  func.func @transform_4(%arg0: i32) -> (i32, i32) {
    %c0_i32 = arith.constant 0 : i32
    %c0_i32_0 = arith.constant 0 : i32
    %c0_i32_1 = arith.constant 0 : i32
    return %c0_i32, %c0_i32_0 : i32, i32
  }
  func.func @transform_5(%arg0: i32) -> (i32, i32) {
    %c0_i32 = arith.constant 0 : i32
    %c0_i32_0 = arith.constant 0 : i32
    return %arg0, %c0_i32 : i32, i32
  }
}

</mosaic_0001>

<llo_original>
// kernel: tpu_custom_call.1
$region0: #{tpu_custom_call.1}
  #allocation0 [shape = 'u32[]', space=smem, size = 0x4, offset = 0x4, fixed_abs, tag = 'smem constant byte address 0x4 - core index']
  #allocation1 [shape = 'u32[144,128]{1,0:T(1,128)}', space=vmem, size = 0x12000, scoped, tag = 'internal scratch']
  %s0 = inlined_call_operand.hbm [shape: bf16[32,256], index: 0, kind: input, shape index: {}]
  %s1 = inlined_call_operand.hbm [shape: bf16[256,256], index: 1, kind: input, shape index: {}]
  %s2 = inlined_call_operand.vmem [shape: f32[1,256], index: 2, kind: input, shape index: {}]
  %s3 = inlined_call_operand.hbm [shape: bf16[512,128], index: 3, kind: input, shape index: {}]
  %s4 = inlined_call_operand.vmem [shape: f32[1,128], index: 4, kind: input, shape index: {}]
  %s5 = inlined_call_operand.hbm [shape: f32[32,128], index: 5, kind: output, shape index: {}]
  %s6 = sld [smem:[#allocation0]]
  $region42: #{tpu_custom_call.1} parent=0
    _
  %s8 = ssub.s32 1, %s6
  %s9 = scalar_select 0, %s8, %s6
  $region1: #{tpu_custom_call.1} parent=0
    #allocation2 [shape = 'u8[16384]{0}', space=vmem, size = 0x4000, scoped, tag = 'input window, operand 0, single buffered']
    #allocation3 [shape = 's32[1]{0}', space=sflag, size = 0x4, scoped, tag = 'scoped memory for tpu_custom_call.1']
    #allocation4 [shape = 's32[1]{0}', space=sflag, size = 0x4, scoped, tag = 'scoped memory for tpu_custom_call.1']
    #allocation5 [shape = 'u8[131072]{0}', space=vmem, size = 0x20000, scoped, tag = 'input window, operand 1, single buffered']
    #allocation6 [shape = 's32[1]{0}', space=sflag, size = 0x4, scoped, tag = 'scoped memory for tpu_custom_call.1']
    #allocation7 [shape = 'u8[131072]{0}', space=vmem, size = 0x20000, scoped, tag = 'input window, operand 3, single buffered']
    #allocation8 [shape = 'u8[16384]{0}', space=vmem, size = 0x4000, scoped, tag = 'output window, operand 0, single buffered']
    %10 = vsyncpa [#allocation3], 0
    %11 = vsyncpa [#allocation6], 0
    %12 = vsyncpa [#allocation4], 0
    // Predicated region
    $region2: #{tpu_custom_call.1} parent=1 // pred_check
      _
    $region3: #{tpu_custom_call.1} parent=1 // pred_check_branch
      %14 = sbr.rel (0) target = $region5
    $region4: #{tpu_custom_call.1} parent=1 // pred_region
      %s16 = ssub.s32 512, 512
      %17 = vsyncadd [#allocation3], %s16
      %s18 = sshll.u32 [#allocation2], 4
      %s19 = int_to_ptr.vmem [resolvable:$true] %s18
      %24 = dma.hbm_to_vmem [thread:$0]  %s0, 512, %s19, [#allocation3], 128, 128, 8
    $region5: #{tpu_custom_call.1} parent=1 // pred_fallthru
      _
    // Predicated region
    $region6: #{tpu_custom_call.1} parent=1 // pred_check
      _
    $region7: #{tpu_custom_call.1} parent=1 // pred_check_branch
      %26 = sbr.rel (0) target = $region9
    $region8: #{tpu_custom_call.1} parent=1 // pred_region
      %s28 = ssub.s32 4096, 4096
      %29 = vsyncadd [#allocation6], %s28
      %s30 = sshll.u32 [#allocation5], 4
      %s31 = int_to_ptr.vmem [resolvable:$true] %s30
      %36 = dma.hbm_to_vmem [thread:$0]  %s1, 4096, %s31, [#allocation6], 128, 128, 8
    $region9: #{tpu_custom_call.1} parent=1 // pred_fallthru
      _
    // Predicated region
    $region10: #{tpu_custom_call.1} parent=1 // pred_check
      _
    $region11: #{tpu_custom_call.1} parent=1 // pred_check_branch
      %38 = sbr.rel (0) target = $region13
    $region12: #{tpu_custom_call.1} parent=1 // pred_region
      _
    $region13: #{tpu_custom_call.1} parent=1 // pred_fallthru
      _
    // Predicated region
    $region14: #{tpu_custom_call.1} parent=1 // pred_check
      _
    $region15: #{tpu_custom_call.1} parent=1 // pred_check_branch
      %40 = sbr.rel (0) target = $region17
    $region16: #{tpu_custom_call.1} parent=1 // pred_region
      %s42 = ssub.s32 4096, 4096
      %43 = vsyncadd [#allocation6], %s42
      %s44 = sshll.u32 [#allocation7], 4
      %s45 = int_to_ptr.vmem [resolvable:$true] %s44
      %50 = dma.hbm_to_vmem [thread:$0]  %s3, 4096, %s45, [#allocation6], 64, 64, 4
    $region17: #{tpu_custom_call.1} parent=1 // pred_fallthru
      _
    // Predicated region
    $region18: #{tpu_custom_call.1} parent=1 // pred_check
      _
    $region19: #{tpu_custom_call.1} parent=1 // pred_check_branch
      %52 = sbr.rel (0) target = $region21
    $region20: #{tpu_custom_call.1} parent=1 // pred_region
      _
    $region21: #{tpu_custom_call.1} parent=1 // pred_fallthru
      _
    // Predicated region
    $region22: #{tpu_custom_call.1} parent=1 // pred_check
      _
    $region23: #{tpu_custom_call.1} parent=1 // pred_check_branch
      %54 = sbr.rel (0) target = $region25
    $region24: #{tpu_custom_call.1} parent=1 // pred_region
      %55 = dma.done [#allocation3], 512
    $region25: #{tpu_custom_call.1} parent=1 // pred_fallthru
      _
    // Predicated region
    $region26: #{tpu_custom_call.1} parent=1 // pred_check
      _
    $region27: #{tpu_custom_call.1} parent=1 // pred_check_branch
      %57 = sbr.rel (0) target = $region29
    $region28: #{tpu_custom_call.1} parent=1 // pred_region
      %58 = dma.done [#allocation6], 4096
    $region29: #{tpu_custom_call.1} parent=1 // pred_fallthru
      _
    // Predicated region
    $region30: #{tpu_custom_call.1} parent=1 // pred_check
      _
    $region31: #{tpu_custom_call.1} parent=1 // pred_check_branch
      %60 = sbr.rel (0) target = $region33
    $region32: #{tpu_custom_call.1} parent=1 // pred_region
      %61 = dma.done [#allocation6], 4096
    $region33: #{tpu_custom_call.1} parent=1 // pred_fallthru
      _
    %v63 = vld [vmem:[#allocation2] sm:$0xff]
    %v64 = vld [vmem:[#allocation2 + $0x8] sm:$0xff]
    %v65 = vld [vmem:[#allocation2 + $0x10] sm:$0xff]
    %v66 = vld [vmem:[#allocation2 + $0x18] sm:$0xff]
    %v67 = vmax.bf16 %v63, 0
    %v68 = vmax.bf16 %v64, 0
    %v69 = vmax.bf16 %v65, 0
    %v70 = vmax.bf16 %v66, 0
    %v71 = vld [vmem:[#allocation5] sm:$0xff]
    %v72 = vld [vmem:[#allocation5 + $0x8] sm:$0xff]
    %v73 = vld [vmem:[#allocation5 + $0x10] sm:$0xff]
    %v74 = vld [vmem:[#allocation5 + $0x18] sm:$0xff]
    %v75 = vld [vmem:[#allocation5 + $0x20] sm:$0xff]
    %v76 = vld [vmem:[#allocation5 + $0x28] sm:$0xff]
    %v77 = vld [vmem:[#allocation5 + $0x30] sm:$0xff]
    %v78 = vld [vmem:[#allocation5 + $0x38] sm:$0xff]
    %v79 = vld [vmem:[#allocation5 + $0x40] sm:$0xff]
    %v80 = vld [vmem:[#allocation5 + $0x48] sm:$0xff]
    %v81 = vld [vmem:[#allocation5 + $0x50] sm:$0xff]
    %v82 = vld [vmem:[#allocation5 + $0x58] sm:$0xff]
    %v83 = vld [vmem:[#allocation5 + $0x60] sm:$0xff]
    %v84 = vld [vmem:[#allocation5 + $0x68] sm:$0xff]
    %v85 = vld [vmem:[#allocation5 + $0x70] sm:$0xff]
    %v86 = vld [vmem:[#allocation5 + $0x78] sm:$0xff]
    %v87 = vld [vmem:[#allocation5 + $0x80] sm:$0xff]
    %v88 = vld [vmem:[#allocation5 + $0x88] sm:$0xff]
    %v89 = vld [vmem:[#allocation5 + $0x90] sm:$0xff]
    %v90 = vld [vmem:[#allocation5 + $0x98] sm:$0xff]
    %v91 = vld [vmem:[#allocation5 + $0xa0] sm:$0xff]
    %v92 = vld [vmem:[#allocation5 + $0xa8] sm:$0xff]
    %v93 = vld [vmem:[#allocation5 + $0xb0] sm:$0xff]
    %v94 = vld [vmem:[#allocation5 + $0xb8] sm:$0xff]
    %v95 = vld [vmem:[#allocation5 + $0xc0] sm:$0xff]
    %v96 = vld [vmem:[#allocation5 + $0xc8] sm:$0xff]
    %v97 = vld [vmem:[#allocation5 + $0xd0] sm:$0xff]
    %v98 = vld [vmem:[#allocation5 + $0xd8] sm:$0xff]
    %v99 = vld [vmem:[#allocation5 + $0xe0] sm:$0xff]
    %v100 = vld [vmem:[#allocation5 + $0xe8] sm:$0xff]
    %v101 = vld [vmem:[#allocation5 + $0xf0] sm:$0xff]
    %v102 = vld [vmem:[#allocation5 + $0xf8] sm:$0xff]
    %v103 = vld [vmem:[%s2] sm:$0x3]
    %v105 = vlaneseq
    %v106 = vshrl.u32 %v105, 7
    %v107 = vsub.s32 0, %v106
    %v108 = vrot.slane %v103, %v107
    %v109 = vlaneseq
    %v110 = vshrl.u32 %v109, 7
    %v111 = vsub.s32 1, %v110
    %v112 = vrot.slane %v103, %v111
    %v119 = vunpack.c.l.b16 %v67
    %v120 = vunpack.c.h.b16 %v67
    %v121 = vunpack.c.l.b16 %v68
    %v122 = vunpack.c.h.b16 %v68
    %v123 = vunpack.c.l.b16 %v69
    %v124 = vunpack.c.h.b16 %v69
    %v125 = vunpack.c.l.b16 %v70
    %v126 = vunpack.c.h.b16 %v70
    %v127 = vpack.c.b16 %v121, %v119
    %v128 = vpack.c.b16 %v122, %v120
    %v129 = vpack.c.b16 %v125, %v123
    %v130 = vpack.c.b16 %v126, %v124
    %v167 = vunpack.c.l.b16 %v71
    %v168 = vunpack.c.h.b16 %v71
    %v169 = vunpack.c.l.b16 %v72
    %v170 = vunpack.c.h.b16 %v72
    %v171 = vunpack.c.l.b16 %v73
    %v172 = vunpack.c.h.b16 %v73
    %v173 = vunpack.c.l.b16 %v74
    %v174 = vunpack.c.h.b16 %v74
    %v175 = vunpack.c.l.b16 %v75
    %v176 = vunpack.c.h.b16 %v75
    %v177 = vunpack.c.l.b16 %v76
    %v178 = vunpack.c.h.b16 %v76
    %v179 = vunpack.c.l.b16 %v77
    %v180 = vunpack.c.h.b16 %v77
    %v181 = vunpack.c.l.b16 %v78
    %v182 = vunpack.c.h.b16 %v78
    %v183 = vunpack.c.l.b16 %v79
    %v184 = vunpack.c.h.b16 %v79
    %v185 = vunpack.c.l.b16 %v80
    %v186 = vunpack.c.h.b16 %v80
    %v187 = vunpack.c.l.b16 %v81
    %v188 = vunpack.c.h.b16 %v81
    %v189 = vunpack.c.l.b16 %v82
    %v190 = vunpack.c.h.b16 %v82
    %v191 = vunpack.c.l.b16 %v83
    %v192 = vunpack.c.h.b16 %v83
    %v193 = vunpack.c.l.b16 %v84
    %v194 = vunpack.c.h.b16 %v84
    %v195 = vunpack.c.l.b16 %v85
    %v196 = vunpack.c.h.b16 %v85
    %v197 = vunpack.c.l.b16 %v86
    %v198 = vunpack.c.h.b16 %v86
    %v199 = vunpack.c.l.b16 %v87
    %v200 = vunpack.c.h.b16 %v87
    %v201 = vunpack.c.l.b16 %v88
    %v202 = vunpack.c.h.b16 %v88
    %v203 = vunpack.c.l.b16 %v89
    %v204 = vunpack.c.h.b16 %v89
    %v205 = vunpack.c.l.b16 %v90
    %v206 = vunpack.c.h.b16 %v90
    %v207 = vunpack.c.l.b16 %v91
    %v208 = vunpack.c.h.b16 %v91
    %v209 = vunpack.c.l.b16 %v92
    %v210 = vunpack.c.h.b16 %v92
    %v211 = vunpack.c.l.b16 %v93
    %v212 = vunpack.c.h.b16 %v93
    %v213 = vunpack.c.l.b16 %v94
    %v214 = vunpack.c.h.b16 %v94
    %v215 = vunpack.c.l.b16 %v95
    %v216 = vunpack.c.h.b16 %v95
    %v217 = vunpack.c.l.b16 %v96
    %v218 = vunpack.c.h.b16 %v96
    %v219 = vunpack.c.l.b16 %v97
    %v220 = vunpack.c.h.b16 %v97
    %v221 = vunpack.c.l.b16 %v98
    %v222 = vunpack.c.h.b16 %v98
    %v223 = vunpack.c.l.b16 %v99
    %v224 = vunpack.c.h.b16 %v99
    %v225 = vunpack.c.l.b16 %v100
    %v226 = vunpack.c.h.b16 %v100
    %v227 = vunpack.c.l.b16 %v101
    %v228 = vunpack.c.h.b16 %v101
    %v229 = vunpack.c.l.b16 %v102
    %v230 = vunpack.c.h.b16 %v102
    %v231 = vpack.c.b16 %v169, %v167
    %v232 = vpack.c.b16 %v170, %v168
    %v233 = vpack.c.b16 %v173, %v171
    %v234 = vpack.c.b16 %v174, %v172
    %v235 = vpack.c.b16 %v177, %v175
    %v236 = vpack.c.b16 %v178, %v176
    %v237 = vpack.c.b16 %v181, %v179
    %v238 = vpack.c.b16 %v182, %v180
    %v239 = vpack.c.b16 %v185, %v183
    %v240 = vpack.c.b16 %v186, %v184
    %v241 = vpack.c.b16 %v189, %v187
    %v242 = vpack.c.b16 %v190, %v188
    %v243 = vpack.c.b16 %v193, %v191
    %v244 = vpack.c.b16 %v194, %v192
    %v245 = vpack.c.b16 %v197, %v195
    %v246 = vpack.c.b16 %v198, %v196
    %v247 = vpack.c.b16 %v201, %v199
    %v248 = vpack.c.b16 %v202, %v200
    %v249 = vpack.c.b16 %v205, %v203
    %v250 = vpack.c.b16 %v206, %v204
    %v251 = vpack.c.b16 %v209, %v207
    %v252 = vpack.c.b16 %v210, %v208
    %v253 = vpack.c.b16 %v213, %v211
    %v254 = vpack.c.b16 %v214, %v212
    %v255 = vpack.c.b16 %v217, %v215
    %v256 = vpack.c.b16 %v218, %v216
    %v257 = vpack.c.b16 %v221, %v219
    %v258 = vpack.c.b16 %v222, %v220
    %v259 = vpack.c.b16 %v225, %v223
    %v260 = vpack.c.b16 %v226, %v224
    %v261 = vpack.c.b16 %v229, %v227
    %v262 = vpack.c.b16 %v230, %v228
    %295 = vmatprep.subr.bf16.mxu0 %v246
    %296 = vmatpush1.bf16.msra.mxu0 %v245
    %297 = vmatprep.subr.bf16.mxu0 %v244
    %298 = vmatpush1.bf16.msra.mxu0 %v243
    %299 = vmatprep.subr.bf16.mxu0 %v242
    %300 = vmatpush1.bf16.msra.mxu0 %v241
    %301 = vmatprep.subr.bf16.mxu0 %v240
    %302 = vmatpush1.bf16.msra.mxu0 %v239
    %303 = vmatprep.subr.bf16.mxu0 %v238
    %304 = vmatpush1.bf16.msra.mxu0 %v237
    %305 = vmatprep.subr.bf16.mxu0 %v236
    %306 = vmatpush1.bf16.msra.mxu0 %v235
    %307 = vmatprep.subr.bf16.mxu0 %v234
    %308 = vmatpush1.bf16.msra.mxu0 %v233
    %309 = vmatprep.subr.bf16.mxu0 %v232
    %310 = vmatpush1.bf16.msra.mxu0 %v231
    %311 = vmatprep.subr.bf16.mxu0 %v262
    %312 = vmatpush2.bf16.msra.mxu0 %v261
    %313 = vmatprep.subr.bf16.mxu0 %v260
    %314 = vmatpush2.bf16.msra.mxu0 %v259
    %315 = vmatprep.subr.bf16.mxu0 %v258
    %316 = vmatpush2.bf16.msra.mxu0 %v257
    %317 = vmatprep.subr.bf16.mxu0 %v256
    %318 = vmatpush2.bf16.msra.mxu0 %v255
    %319 = vmatprep.subr.bf16.mxu0 %v254
    %320 = vmatpush2.bf16.msra.mxu0 %v253
    %321 = vmatprep.subr.bf16.mxu0 %v252
    %322 = vmatpush2.bf16.msra.mxu0 %v251
    %323 = vmatprep.subr.bf16.mxu0 %v250
    %324 = vmatpush2.bf16.msra.mxu0 %v249
    %325 = vmatprep.subr.bf16.mxu0 %v248
    %326 = vmatpush2.bf16.msra.mxu0 %v247
    %327 = vmatprep.mubr.bf16.mxu0 %v128
    %328 = vmatmul.mubr.bf16.gmra.mxu0 %v127
    %v329 = vpop.f32.mrf.mxu0
    %v330 = vadd.f32 %v108, %v329
    %v331 = vpop.f32.mrf.mxu0
    %v332 = vadd.f32 %v112, %v331
    %v333 = vpop.f32.mrf.mxu0
    %v334 = vadd.f32 %v108, %v333
    %v335 = vpop.f32.mrf.mxu0
    %v336 = vadd.f32 %v112, %v335
    %337 = vmatprep.mubr.bf16.mxu0 %v130
    %338 = vmatmul.mubr.bf16.gmra.mxu0 %v129
    %v339 = vpop.f32.mrf.mxu0
    %v340 = vadd.f32 %v108, %v339
    %v341 = vpop.f32.mrf.mxu0
    %v342 = vadd.f32 %v112, %v341
    %v343 = vpop.f32.mrf.mxu0
    %v344 = vadd.f32 %v108, %v343
    %v345 = vpop.f32.mrf.mxu0
    %v346 = vadd.f32 %v112, %v345
    %347 = vdwg.mxu0
    %v348 = vmax.f32 %v330, 0.0
    %v349 = vmax.f32 %v332, 0.0
    %v350 = vmax.f32 %v334, 0.0
    %v351 = vmax.f32 %v336, 0.0
    %v352 = vmax.f32 %v340, 0.0
    %v353 = vmax.f32 %v342, 0.0
    %v354 = vmax.f32 %v344, 0.0
    %v355 = vmax.f32 %v346, 0.0
    %v356 = vpack.c.bf16 %v350, %v348
    %v357 = vpack.c.bf16 %v351, %v349
    %v358 = vpack.c.bf16 %v354, %v352
    %v359 = vpack.c.bf16 %v355, %v353
    %v360 = vld [vmem:[#allocation7] sm:$0xf]
    %v361 = vld [vmem:[#allocation7 + $0x4] sm:$0xf]
    %v362 = vld [vmem:[#allocation7 + $0x8] sm:$0xf]
    %v363 = vld [vmem:[#allocation7 + $0xc] sm:$0xf]
    %v364 = vld [vmem:[#allocation7 + $0x10] sm:$0xf]
    %v365 = vld [vmem:[#allocation7 + $0x14] sm:$0xf]
    %v366 = vld [vmem:[#allocation7 + $0x18] sm:$0xf]
    %v367 = vld [vmem:[#allocation7 + $0x1c] sm:$0xf]
    %v368 = vld [vmem:[#allocation7 + $0x20] sm:$0xf]
    %v369 = vld [vmem:[#allocation7 + $0x24] sm:$0xf]
    %v370 = vld [vmem:[#allocation7 + $0x28] sm:$0xf]
    %v371 = vld [vmem:[#allocation7 + $0x2c] sm:$0xf]
    %v372 = vld [vmem:[#allocation7 + $0x30] sm:$0xf]
    %v373 = vld [vmem:[#allocation7 + $0x34] sm:$0xf]
    %v374 = vld [vmem:[#allocation7 + $0x38] sm:$0xf]
    %v375 = vld [vmem:[#allocation7 + $0x3c] sm:$0xf]
    %v376 = vld [vmem:[#allocation7 + $0x40] sm:$0xf]
    %v377 = vld [vmem:[#allocation7 + $0x44] sm:$0xf]
    %v378 = vld [vmem:[#allocation7 + $0x48] sm:$0xf]
    %v379 = vld [vmem:[#allocation7 + $0x4c] sm:$0xf]
    %v380 = vld [vmem:[#allocation7 + $0x50] sm:$0xf]
    %v381 = vld [vmem:[#allocation7 + $0x54] sm:$0xf]
    %v382 = vld [vmem:[#allocation7 + $0x58] sm:$0xf]
    %v383 = vld [vmem:[#allocation7 + $0x5c] sm:$0xf]
    %v384 = vld [vmem:[#allocation7 + $0x60] sm:$0xf]
    %v385 = vld [vmem:[#allocation7 + $0x64] sm:$0xf]
    %v386 = vld [vmem:[#allocation7 + $0x68] sm:$0xf]
    %v387 = vld [vmem:[#allocation7 + $0x6c] sm:$0xf]
    %v388 = vld [vmem:[#allocation7 + $0x70] sm:$0xf]
    %v389 = vld [vmem:[#allocation7 + $0x74] sm:$0xf]
    %v390 = vld [vmem:[#allocation7 + $0x78] sm:$0xf]
    %v391 = vld [vmem:[#allocation7 + $0x7c] sm:$0xf]
    %v392 = vld [vmem:[#allocation7 + $0x80] sm:$0xf]
    %v393 = vld [vmem:[#allocation7 + $0x84] sm:$0xf]
    %v394 = vld [vmem:[#allocation7 + $0x88] sm:$0xf]
    %v395 = vld [vmem:[#allocation7 + $0x8c] sm:$0xf]
    %v396 = vld [vmem:[#allocation7 + $0x90] sm:$0xf]
    %v397 = vld [vmem:[#allocation7 + $0x94] sm:$0xf]
    %v398 = vld [vmem:[#allocation7 + $0x98] sm:$0xf]
    %v399 = vld [vmem:[#allocation7 + $0x9c] sm:$0xf]
    %v400 = vld [vmem:[#allocation7 + $0xa0] sm:$0xf]
    %v401 = vld [vmem:[#allocation7 + $0xa4] sm:$0xf]
    %v402 = vld [vmem:[#allocation7 + $0xa8] sm:$0xf]
    %v403 = vld [vmem:[#allocation7 + $0xac] sm:$0xf]
    %v404 = vld [vmem:[#allocation7 + $0xb0] sm:$0xf]
    %v405 = vld [vmem:[#allocation7 + $0xb4] sm:$0xf]
    %v406 = vld [vmem:[#allocation7 + $0xb8] sm:$0xf]
    %v407 = vld [vmem:[#allocation7 + $0xbc] sm:$0xf]
    %v408 = vld [vmem:[#allocation7 + $0xc0] sm:$0xf]
    %v409 = vld [vmem:[#allocation7 + $0xc4] sm:$0xf]
    %v410 = vld [vmem:[#allocation7 + $0xc8] sm:$0xf]
    %v411 = vld [vmem:[#allocation7 + $0xcc] sm:$0xf]
    %v412 = vld [vmem:[#allocation7 + $0xd0] sm:$0xf]
    %v413 = vld [vmem:[#allocation7 + $0xd4] sm:$0xf]
    %v414 = vld [vmem:[#allocation7 + $0xd8] sm:$0xf]
    %v415 = vld [vmem:[#allocation7 + $0xdc] sm:$0xf]
    %v416 = vld [vmem:[#allocation7 + $0xe0] sm:$0xf]
    %v417 = vld [vmem:[#allocation7 + $0xe4] sm:$0xf]
    %v418 = vld [vmem:[#allocation7 + $0xe8] sm:$0xf]
    %v419 = vld [vmem:[#allocation7 + $0xec] sm:$0xf]
    %v420 = vld [vmem:[#allocation7 + $0xf0] sm:$0xf]
    %v421 = vld [vmem:[#allocation7 + $0xf4] sm:$0xf]
    %v422 = vld [vmem:[#allocation7 + $0xf8] sm:$0xf]
    %v423 = vld [vmem:[#allocation7 + $0xfc] sm:$0xf]
    %v456 = vunpack.c.l.b16 %v392
    %v457 = vunpack.c.l.b16 %v393
    %v458 = vunpack.c.l.b16 %v394
    %v459 = vunpack.c.l.b16 %v395
    %v460 = vunpack.c.l.b16 %v396
    %v461 = vunpack.c.l.b16 %v397
    %v462 = vunpack.c.l.b16 %v398
    %v463 = vunpack.c.l.b16 %v399
    %v464 = vunpack.c.l.b16 %v400
    %v465 = vunpack.c.l.b16 %v401
    %v466 = vunpack.c.l.b16 %v402
    %v467 = vunpack.c.l.b16 %v403
    %v468 = vunpack.c.l.b16 %v404
    %v469 = vunpack.c.l.b16 %v405
    %v470 = vunpack.c.l.b16 %v406
    %v471 = vunpack.c.l.b16 %v407
    %v472 = vunpack.c.l.b16 %v408
    %v473 = vunpack.c.l.b16 %v409
    %v474 = vunpack.c.l.b16 %v410
    %v475 = vunpack.c.l.b16 %v411
    %v476 = vunpack.c.l.b16 %v412
    %v477 = vunpack.c.l.b16 %v413
    %v478 = vunpack.c.l.b16 %v414
    %v479 = vunpack.c.l.b16 %v415
    %v480 = vunpack.c.l.b16 %v416
    %v481 = vunpack.c.l.b16 %v417
    %v482 = vunpack.c.l.b16 %v418
    %v483 = vunpack.c.l.b16 %v419
    %v484 = vunpack.c.l.b16 %v420
    %v485 = vunpack.c.l.b16 %v421
    %v486 = vunpack.c.l.b16 %v422
    %v487 = vunpack.c.l.b16 %v423
    %v488 = vpack.c.b16 %v457, %v456
    %v489 = vpack.c.b16 %v459, %v458
    %v490 = vpack.c.b16 %v461, %v460
    %v491 = vpack.c.b16 %v463, %v462
    %v492 = vpack.c.b16 %v465, %v464
    %v493 = vpack.c.b16 %v467, %v466
    %v494 = vpack.c.b16 %v469, %v468
    %v495 = vpack.c.b16 %v471, %v470
    %v496 = vpack.c.b16 %v473, %v472
    %v497 = vpack.c.b16 %v475, %v474
    %v498 = vpack.c.b16 %v477, %v476
    %v499 = vpack.c.b16 %v479, %v478
    %v500 = vpack.c.b16 %v481, %v480
    %v501 = vpack.c.b16 %v483, %v482
    %v502 = vpack.c.b16 %v485, %v484
    %v503 = vpack.c.b16 %v487, %v486
    %520 = vmatprep.subr.bf16.mxu0 0
    %521 = vmatpush1.bf16.msra.mxu0 %v495
    %522 = vmatprep.subr.bf16.mxu0 0
    %523 = vmatpush1.bf16.msra.mxu0 %v494
    %524 = vmatprep.subr.bf16.mxu0 0
    %525 = vmatpush1.bf16.msra.mxu0 %v493
    %526 = vmatprep.subr.bf16.mxu0 0
    %527 = vmatpush1.bf16.msra.mxu0 %v492
    %528 = vmatprep.subr.bf16.mxu0 0
    %529 = vmatpush1.bf16.msra.mxu0 %v491
    %530 = vmatprep.subr.bf16.mxu0 0
    %531 = vmatpush1.bf16.msra.mxu0 %v490
    %532 = vmatprep.subr.bf16.mxu0 0
    %533 = vmatpush1.bf16.msra.mxu0 %v489
    %534 = vmatprep.subr.bf16.mxu0 0
    %535 = vmatpush1.bf16.msra.mxu0 %v488
    %536 = vmatprep.subr.bf16.mxu0 0
    %537 = vmatpush2.bf16.msra.mxu0 %v503
    %538 = vmatprep.subr.bf16.mxu0 0
    %539 = vmatpush2.bf16.msra.mxu0 %v502
    %540 = vmatprep.subr.bf16.mxu0 0
    %541 = vmatpush2.bf16.msra.mxu0 %v501
    %542 = vmatprep.subr.bf16.mxu0 0
    %543 = vmatpush2.bf16.msra.mxu0 %v500
    %544 = vmatprep.subr.bf16.mxu0 0
    %545 = vmatpush2.bf16.msra.mxu0 %v499
    %546 = vmatprep.subr.bf16.mxu0 0
    %547 = vmatpush2.bf16.msra.mxu0 %v498
    %548 = vmatprep.subr.bf16.mxu0 0
    %549 = vmatpush2.bf16.msra.mxu0 %v497
    %550 = vmatprep.subr.bf16.mxu0 0
    %551 = vmatpush2.bf16.msra.mxu0 %v496
    %552 = vmatprep.mubr.bf16.mxu0 %v128
    %553 = vmatmul.mubr.bf16.gmra.mxu0 %v127
    %v554 = vpop.f32.mrf.mxu0
    %v555 = vadd.f32 0.0, %v554
    %v556 = vpop.f32.mrf.mxu0
    %v557 = vpop.f32.mrf.mxu0
    %v558 = vadd.f32 0.0, %v557
    %v559 = vpop.f32.mrf.mxu0
    %560 = vmatprep.mubr.bf16.mxu0 %v130
    %561 = vmatmul.mubr.bf16.gmra.mxu0 %v129
    %v562 = vpop.f32.mrf.mxu0
    %v563 = vadd.f32 0.0, %v562
    %v564 = vpop.f32.mrf.mxu0
    %v565 = vpop.f32.mrf.mxu0
    %v566 = vadd.f32 0.0, %v565
    %v567 = vpop.f32.mrf.mxu0
    %568 = vdwg.mxu0
    %v601 = vunpack.c.l.b16 %v360
    %v602 = vunpack.c.l.b16 %v361
    %v603 = vunpack.c.l.b16 %v362
    %v604 = vunpack.c.l.b16 %v363
    %v605 = vunpack.c.l.b16 %v364
    %v606 = vunpack.c.l.b16 %v365
    %v607 = vunpack.c.l.b16 %v366
    %v608 = vunpack.c.l.b16 %v367
    %v609 = vunpack.c.l.b16 %v368
    %v610 = vunpack.c.l.b16 %v369
    %v611 = vunpack.c.l.b16 %v370
    %v612 = vunpack.c.l.b16 %v371
    %v613 = vunpack.c.l.b16 %v372
    %v614 = vunpack.c.l.b16 %v373
    %v615 = vunpack.c.l.b16 %v374
    %v616 = vunpack.c.l.b16 %v375
    %v617 = vunpack.c.l.b16 %v376
    %v618 = vunpack.c.l.b16 %v377
    %v619 = vunpack.c.l.b16 %v378
    %v620 = vunpack.c.l.b16 %v379
    %v621 = vunpack.c.l.b16 %v380
    %v622 = vunpack.c.l.b16 %v381
    %v623 = vunpack.c.l.b16 %v382
    %v624 = vunpack.c.l.b16 %v383
    %v625 = vunpack.c.l.b16 %v384
    %v626 = vunpack.c.l.b16 %v385
    %v627 = vunpack.c.l.b16 %v386
    %v628 = vunpack.c.l.b16 %v387
    %v629 = vunpack.c.l.b16 %v388
    %v630 = vunpack.c.l.b16 %v389
    %v631 = vunpack.c.l.b16 %v390
    %v632 = vunpack.c.l.b16 %v391
    %v633 = vpack.c.b16 %v602, %v601
    %v634 = vpack.c.b16 %v604, %v603
    %v635 = vpack.c.b16 %v606, %v605
    %v636 = vpack.c.b16 %v608, %v607
    %v637 = vpack.c.b16 %v610, %v609
    %v638 = vpack.c.b16 %v612, %v611
    %v639 = vpack.c.b16 %v614, %v613
    %v640 = vpack.c.b16 %v616, %v615
    %v641 = vpack.c.b16 %v618, %v617
    %v642 = vpack.c.b16 %v620, %v619
    %v643 = vpack.c.b16 %v622, %v621
    %v644 = vpack.c.b16 %v624, %v623
    %v645 = vpack.c.b16 %v626, %v625
    %v646 = vpack.c.b16 %v628, %v627
    %v647 = vpack.c.b16 %v630, %v629
    %v648 = vpack.c.b16 %v632, %v631
    %665 = vmatprep.subr.bf16.mxu0 0
    %666 = vmatpush1.bf16.msra.mxu0 %v640
    %667 = vmatprep.subr.bf16.mxu0 0
    %668 = vmatpush1.bf16.msra.mxu0 %v639
    %669 = vmatprep.subr.bf16.mxu0 0
    %670 = vmatpush1.bf16.msra.mxu0 %v638
    %671 = vmatprep.subr.bf16.mxu0 0
    %672 = vmatpush1.bf16.msra.mxu0 %v637
    %673 = vmatprep.subr.bf16.mxu0 0
    %674 = vmatpush1.bf16.msra.mxu0 %v636
    %675 = vmatprep.subr.bf16.mxu0 0
    %676 = vmatpush1.bf16.msra.mxu0 %v635
    %677 = vmatprep.subr.bf16.mxu0 0
    %678 = vmatpush1.bf16.msra.mxu0 %v634
    %679 = vmatprep.subr.bf16.mxu0 0
    %680 = vmatpush1.bf16.msra.mxu0 %v633
    %681 = vmatprep.subr.bf16.mxu0 0
    %682 = vmatpush2.bf16.msra.mxu0 %v648
    %683 = vmatprep.subr.bf16.mxu0 0
    %684 = vmatpush2.bf16.msra.mxu0 %v647
    %685 = vmatprep.subr.bf16.mxu0 0
    %686 = vmatpush2.bf16.msra.mxu0 %v646
    %687 = vmatprep.subr.bf16.mxu0 0
    %688 = vmatpush2.bf16.msra.mxu0 %v645
    %689 = vmatprep.subr.bf16.mxu0 0
    %690 = vmatpush2.bf16.msra.mxu0 %v644
    %691 = vmatprep.subr.bf16.mxu0 0
    %692 = vmatpush2.bf16.msra.mxu0 %v643
    %693 = vmatprep.subr.bf16.mxu0 0
    %694 = vmatpush2.bf16.msra.mxu0 %v642
    %695 = vmatprep.subr.bf16.mxu0 0
    %696 = vmatpush2.bf16.msra.mxu0 %v641
    %697 = vmatprep.mubr.bf16.mxu0 %v357
    %698 = vmatmul.mubr.bf16.gmra.mxu0 %v356
    %v699 = vpop.f32.mrf.mxu0
    %v700 = vadd.f32 %v555, %v699
    %v701 = vpop.f32.mrf.mxu0
    %v702 = vpop.f32.mrf.mxu0
    %v703 = vadd.f32 %v558, %v702
    %v704 = vpop.f32.mrf.mxu0
    %705 = vmatprep.mubr.bf16.mxu0 %v359
    %706 = vmatmul.mubr.bf16.gmra.mxu0 %v358
    %v707 = vpop.f32.mrf.mxu0
    %v708 = vadd.f32 %v563, %v707
    %v709 = vpop.f32.mrf.mxu0
    %v710 = vpop.f32.mrf.mxu0
    %v711 = vadd.f32 %v566, %v710
    %v712 = vpop.f32.mrf.mxu0
    %713 = vdwg.mxu0
    %v714 = vld [vmem:[%s4] sm:$0x1]
    %v716 = vlaneseq
    %v717 = vshrl.u32 %v716, 7
    %v718 = vsub.s32 0, %v717
    %v719 = vrot.slane %v714, %v718
    %v721 = vadd.f32 %v700, %v719
    %v722 = vadd.f32 %v703, %v719
    %v723 = vadd.f32 %v708, %v719
    %v724 = vadd.f32 %v711, %v719
    %725 = vst [vmem:[#allocation8] sm:$0xff] %v721
    %726 = vst [vmem:[#allocation8 + $0x8] sm:$0xff] %v722
    %727 = vst [vmem:[#allocation8 + $0x10] sm:$0xff] %v723
    %728 = vst [vmem:[#allocation8 + $0x18] sm:$0xff] %v724
    // Predicated region
    $region34: #{tpu_custom_call.1} parent=1 // pred_check
      _
    $region35: #{tpu_custom_call.1} parent=1 // pred_check_branch
      %730 = sbr.rel (0) target = $region37
    $region36: #{tpu_custom_call.1} parent=1 // pred_region
      %s732 = ssub.s32 512, 512
      %733 = vsyncadd [#allocation4], %s732
      %s734 = sshll.u32 [#allocation8], 4
      %s735 = int_to_ptr.vmem [resolvable:$true] %s734
      %740 = dma.vmem_to_hbm [thread:$0]  %s735, 512, %s5, [#allocation4], 128, 128, 8
    $region37: #{tpu_custom_call.1} parent=1 // pred_fallthru
      _
    // Predicated region
    $region38: #{tpu_custom_call.1} parent=1 // pred_check
      _
    $region39: #{tpu_custom_call.1} parent=1 // pred_check_branch
      %742 = sbr.rel (0) target = $region41
    $region40: #{tpu_custom_call.1} parent=1 // pred_region
      %743 = dma.done [#allocation4], 512
    $region41: #{tpu_custom_call.1} parent=1 // pred_fallthru
      _
    %744 = vsyncpa [#allocation3], 1
    %745 = vsyncpa [#allocation6], 1
    %746 = vsyncpa [#allocation4], 1

</llo_original>
